<compile_context>
chip_gen: v5e
topology: v5e:2x2
jax: 0.10.0
libtpu: 0.0.40
codegen_flags: <defaults>
</compile_context>

<pallas_src>
import jax
import jax.numpy as jnp
from jax import lax
from jax.experimental import pallas as pl
from jax.experimental.pallas import tpu as pltpu

EPS = 1e-5  # InstanceNorm2d default eps


def _cdiv(a, b):
    return (a + b - 1) // b


def _round_up(a, b):
    return _cdiv(a, b) * b


def _make_conv_stats_kernel(tap_offs, tap_rows, tile_p, p_valid, wp, w_out):
    """Tap matmuls into an f32 accumulator + per-tile partial sum / sum-sq.

    tap_offs[i]: static flat lane offset of tap i.
    tap_rows[i]: (row_start, row_stop) of tap i in the stacked-channel axis;
                 tap 0 must cover the full range (it initialises the acc).
    """
    n_taps = len(tap_offs)

    def kernel(xc_ref, xh_ref, *rest):
        w_refs = rest[:n_taps]
        conv_ref, stat_ref, acc_ref = rest[n_taps:]
        t = pl.program_id(1)

        # Current P tile plus a small right halo so every tap slice is static
        # and in bounds.  The clamped halo on the last tile only ever feeds
        # masked / dropped output columns (guaranteed by Pp >= P + Wp + 2).
        win = jnp.concatenate([xc_ref[0], xh_ref[0]], axis=1)       # (K, TP+TH)

        # Tap 0 covers every stacked row -> plain assignment initialises acc.
        acc_ref[...] = jnp.dot(w_refs[0][...],
                               win[:, tap_offs[0]:tap_offs[0] + tile_p],
                               preferred_element_type=jnp.float32)
        for i in range(1, n_taps):
            r0, r1 = tap_rows[i]
            off = tap_offs[i]
            acc_ref[r0:r1, :] += jnp.dot(w_refs[i][...],
                                         win[:, off:off + tile_p],
                                         preferred_element_type=jnp.float32)

        acc = acc_ref[...]
        conv_ref[0] = acc.astype(conv_ref.dtype)                    # lane-dense tile

        # Validity mask generated in-kernel (no mask DMA): flat index < P and
        # column-within-row < Wout.  f32 floor-division is exact (idx << 2^24).
        idx_i = lax.broadcasted_iota(jnp.int32, (1, tile_p), 1) + t * tile_p
        idx_f = idx_i.astype(jnp.float32)
        col = idx_f - jnp.floor(idx_f / float(wp)) * float(wp)
        mask = jnp.where((idx_i < p_valid) & (col < float(w_out)), 1.0, 0.0)

        am = acc * mask
        stat_ref[0, 0, :, 0:1] = jnp.sum(am, axis=1, keepdims=True)
        stat_ref[0, 0, :, 1:2] = jnp.sum(am * am, axis=1, keepdims=True)

    return kernel


def _norm_relu_kernel(conv_ref, stat_ref, o_ref):
    mean = stat_ref[0, :, 0:1]
    inv_std = stat_ref[0, :, 1:2]
    y = (conv_ref[0].astype(jnp.float32) - mean) * inv_std
    o_ref[0] = jnp.maximum(y, 0.0).astype(o_ref.dtype)


def block_B_forward(x, weight, bias=None, dec=False, *, p_tile=2048,
                    compute_dtype=None):
    """Forward of CycleStain block_B.

    dec=False: Conv2d(i_c, o_c, k=3, s=2, p=1)                      weight (o_c, i_c, 3, 3)
    dec=True : ConvTranspose2d(i_c, o_c, k=3, s=2, p=1, out_pad=1)  weight (i_c, o_c, 3, 3)
    followed by InstanceNorm2d (affine=False) and ReLU.

    `bias` is accepted for API parity but unused: a per-channel bias added
    before InstanceNorm2d(affine=False) cancels exactly in (x - mean).
    """
    del bias
    N, C_in, H, W = x.shape
    out_dtype = x.dtype
    cdt = jnp.dtype(compute_dtype) if compute_dtype is not None else jnp.dtype(x.dtype)
    # Cast before the wrapper-side pad / space-to-depth so that full-size XLA
    # pass is already done at the (possibly bf16) compute width.
    x = x.astype(cdt)
    weight = weight.astype(cdt)

    if not dec:
        # stride-2 3x3 conv -> 2x2 stride-1 conv over a 4-phase space-to-depth.
        C_out = weight.shape[0]
        Cp = _round_up(C_out, 8)
        Ho = (H - 1) // 2 + 1
        Wo = (W - 1) // 2 + 1
        R, S = 2 * Ho + 2, 2 * Wo + 2
        xpad = jnp.pad(x, ((0, 0), (0, 0), (1, R - 1 - H), (1, S - 1 - W)))
        xph = xpad.reshape(N, C_in, Ho + 1, 2, Wo + 1, 2)            # (N,ci,a,r,b,c)
        xprep = jnp.transpose(xph, (0, 1, 3, 5, 2, 4)).reshape(
            N, 4 * C_in, Ho + 1, Wo + 1)                             # K order = (ci,r,c)
        K = 4 * C_in
        Hp, Wp = Ho + 1, Wo + 1
        Hout, Wout = Ho, Wo
        n_stack = 1
        R_total = Cp
        # weight (C_out,C_in,3,3) -> 4 tap matrices (Cp, 4*C_in); tap = dh*2+dw,
        # entry (dh,r)/(dw,c) uses W[.., 2*dh+r, 2*dw+c] (zero when > 2).
        w4 = jnp.pad(weight, ((0, Cp - C_out), (0, 0), (0, 1), (0, 1)))
        w6 = w4.reshape(Cp, C_in, 2, 2, 2, 2)                        # (co,ci,dh,r,dw,c)
        wt = jnp.transpose(w6, (2, 4, 0, 1, 3, 5)).reshape(4, Cp, 4 * C_in)
        w_taps = [wt[0], wt[1], wt[2], wt[3]]
        tap_offs = (0, 1, Wp, Wp + 1)
        tap_rows = ((0, Cp),) * 4
    else:
        # stride-2 ConvTranspose -> 4 output phases (polyphase) stacked along the
        # channel axis in the order [(0,0),(0,1),(1,1),(1,0)] so every tap hits a
        # contiguous row range and only the 9 nonzero taps are issued.
        C_out = weight.shape[1]
        Cp = _round_up(C_out, 8)
        xprep = jnp.pad(x, ((0, 0), (0, 0), (0, 1), (0, 1)))         # (N,C_in,H+1,W+1)
        K = C_in
        Hp, Wp = H + 1, W + 1
        Hout, Wout = H, W
        n_stack = 4
        R_total = 4 * Cp
        w_oihw = jnp.transpose(weight, (1, 0, 2, 3))                 # (C_out,C_in,3,3)
        w_p = jnp.pad(w_oihw, ((0, Cp - C_out), (0, 0), (0, 0), (0, 0)))
        # phase (ro,co), tap (dh,dw) -> kernel index kh=KMAP[ro][dh], kw=KMAP[co][dw]
        # with KMAP = {0:{0:1,1:None}, 1:{0:2,1:0}}.
        w_tap00 = jnp.concatenate([w_p[:, :, 1, 1], w_p[:, :, 1, 2],
                                   w_p[:, :, 2, 2], w_p[:, :, 2, 1]], axis=0)
        w_tap01 = jnp.concatenate([w_p[:, :, 1, 0], w_p[:, :, 2, 0]], axis=0)
        w_tap10 = jnp.concatenate([w_p[:, :, 0, 2], w_p[:, :, 0, 1]], axis=0)
        w_tap11 = w_p[:, :, 0, 0]
        w_taps = [w_tap00, w_tap01, w_tap10, w_tap11]
        tap_offs = (0, 1, Wp, Wp + 1)
        tap_rows = ((0, 4 * Cp), (Cp, 3 * Cp), (2 * Cp, 4 * Cp), (2 * Cp, 3 * Cp))

    assert tap_rows[0] == (0, R_total)   # tap 0 initialises the full accumulator

    # ---- flatten spatial, choose P tiling, pad so tap halos stay in bounds ----
    P = Hout * Wp                        # flattened output grid (1 junk col per row)
    TH = _round_up(Wp + 2, 128)          # right-halo width (>= max tap offset Wp+1)
    TP = _round_up(max(int(p_tile), TH), TH)
    TP = min(TP, _round_up(P + Wp + 2, TH))
    n_pt = _cdiv(P + Wp + 2, TP)
    Pp = n_pt * TP
    # Clamped last-tile halo only ever feeds masked / dropped output columns.
    assert Pp >= P + Wp + 2

    xf = xprep.reshape(N, K, Hp * Wp)
    xf = jnp.pad(xf, ((0, 0), (0, 0), (0, Pp - Hp * Wp)))

    halo_blocks = Pp // TH
    halo_step = TP // TH
    count = n_stack * Hout * Wout        # output pixels per image (per channel)

    interm_dtype = jnp.bfloat16 if cdt == jnp.dtype(jnp.bfloat16) else out_dtype

    conv_kernel = _make_conv_stats_kernel(tap_offs, tap_rows, TP, P, Wp, Wout)
    # Tap weights: constant block index -> fetched once per call (VMEM resident).
    w_specs = [pl.BlockSpec(w.shape, lambda n, t: (0, 0)) for w in w_taps]

    conv, pstats = pl.pallas_call(
        conv_kernel,
        out_shape=(jax.ShapeDtypeStruct((N, R_total, Pp), interm_dtype),
                   jax.ShapeDtypeStruct((N, n_pt, R_total, 2), jnp.float32)),
        grid_spec=pltpu.PrefetchScalarGridSpec(
            num_scalar_prefetch=0,
            grid=(N, n_pt),
            in_specs=[
                # current P tile of the flattened input
                pl.BlockSpec((1, K, TP), lambda n, t: (n, 0, t)),
                # right halo (next TH lanes, clamped on the last tile)
                pl.BlockSpec((1, K, TH),
                             lambda n, t: (n, 0, jnp.minimum(
                                 (t + 1) * halo_step, halo_blocks - 1))),
            ] + w_specs,
            out_specs=[
                pl.BlockSpec((1, R_total, TP), lambda n, t: (n, 0, t)),
                pl.BlockSpec((1, 1, R_total, 2), lambda n, t: (n, t, 0, 0)),
            ],
            scratch_shapes=[pltpu.VMEM((R_total, TP), jnp.float32)],
        ),
        compiler_params=pltpu.CompilerParams(
            dimension_semantics=("parallel", "parallel"),
            vmem_limit_bytes=64 * 1024 * 1024),
    )(xf, xf, *w_taps)

    # ---- finalise InstanceNorm statistics from the tiny per-tile partials ----
    tot = pstats.sum(axis=1)                                   # (N, R_total, 2)
    tot = tot.reshape(N, n_stack, Cp, 2).sum(axis=1)           # (N, Cp, 2)
    mean = tot[..., 0] / count
    # One-pass E[x^2]-E[x]^2 in f32, clamped at 0 (can lose precision for
    # near-constant channels with |mean| >> std; acceptable for this workload).
    var = jnp.maximum(tot[..., 1] / count - mean * mean, 0.0)
    inv_std = lax.rsqrt(var + EPS)
    stats = jnp.stack([mean, inv_std], axis=-1)                # (N, Cp, 2)
    stats = jnp.broadcast_to(stats[:, None], (N, n_stack, Cp, 2)).reshape(
        N, R_total, 2)

    y = pl.pallas_call(
        _norm_relu_kernel,
        out_shape=jax.ShapeDtypeStruct((N, R_total, Pp), out_dtype),
        grid_spec=pltpu.PrefetchScalarGridSpec(
            num_scalar_prefetch=0,
            grid=(N, n_pt),
            in_specs=[
                pl.BlockSpec((1, R_total, TP), lambda n, t: (n, 0, t)),
                pl.BlockSpec((1, R_total, 2), lambda n, t: (n, 0, 0)),
            ],
            out_specs=pl.BlockSpec((1, R_total, TP), lambda n, t: (n, 0, t)),
        ),
        compiler_params=pltpu.CompilerParams(
            dimension_semantics=("parallel", "parallel"),
            vmem_limit_bytes=64 * 1024 * 1024),
    )(conv, stats)

    # ---- drop junk columns / flat padding; (dec) interleave the 4 phases ----
    # TODO(synk): fold this epilogue layout pass into kernel 2's out_specs via
    # row-aligned tiling (needs Wp padded to a lane multiple, trade-off).
    if not dec:
        out = y[:, :C_out, :P].reshape(N, C_out, Hout, Wp)[:, :, :, :Wout]
    else:
        y4 = y[:, :, :P].reshape(N, 4, Cp, Hout, Wp)[:, :, :C_out, :, :Wout]
        p00, p01, p11, p10 = y4[:, 0], y4[:, 1], y4[:, 2], y4[:, 3]
        row0 = jnp.stack([p00, p01], axis=-1)                  # ro = 0 columns
        row1 = jnp.stack([p10, p11], axis=-1)                  # ro = 1 columns
        out = jnp.stack([row0, row1], axis=3).reshape(N, C_out, 2 * Hout, 2 * Wout)
    return out


def _ref_block_B(x, weight, bias, dec=False):
    """Pure-JAX reference (conv + bias + InstanceNorm2d + ReLU)."""
    if not dec:
        y = lax.conv_general_dilated(
            x, weight, (2, 2), ((1, 1), (1, 1)),
            dimension_numbers=("NCHW", "OIHW", "NCHW"))
    else:
        w_conv = jnp.transpose(jnp.flip(weight, (2, 3)), (1, 0, 2, 3))
        y = lax.conv_general_dilated(
            x, w_conv, (1, 1), ((1, 2), (1, 2)), lhs_dilation=(2, 2),
            dimension_numbers=("NCHW", "OIHW", "NCHW"))
    y = y + bias.reshape(1, -1, 1, 1)
    mean = y.mean(axis=(2, 3), keepdims=True)
    var = ((y - mean) ** 2).mean(axis=(2, 3), keepdims=True)
    return jnp.maximum((y - mean) / jnp.sqrt(var + EPS), 0.0)


if __name__ == "__main__":
    key = jax.random.PRNGKey(0)
    k1, k2, k3, k4, k5, k6, k7 = jax.random.split(key, 7)

    N, i_c, o_c, H, W = 2, 4, 8, 16, 16
    x = jax.random.normal(k1, (N, i_c, H, W), jnp.float32)

    # Encoder block: Conv2d(i_c -> o_c, k=3, s=2, p=1) + InstanceNorm + ReLU
    w_enc = jax.random.normal(k2, (o_c, i_c, 3, 3), jnp.float32) * 0.1
    b_enc = jax.random.normal(k3, (o_c,), jnp.float32) * 0.1
    y_enc = block_B_forward(x, w_enc, b_enc, dec=False, p_tile=128)
    jax.block_until_ready(y_enc)

    # Decoder block: ConvTranspose2d(o_c -> i_c, k=3, s=2, p=1, op=1) + IN + ReLU
    w_dec = jax.random.normal(k4, (o_c, i_c, 3, 3), jnp.float32) * 0.1
    b_dec = jax.random.normal(k5, (i_c,), jnp.float32) * 0.1
    y_dec = block_B_forward(y_enc, w_dec, b_dec, dec=True, p_tile=128)
    jax.block_until_ready(y_dec)

    # Second decoder config that exercises multiple P tiles (n_pt > 1).
    w_dec2 = jax.random.normal(k6, (i_c, o_c, 3, 3), jnp.float32) * 0.1
    b_dec2 = jax.random.normal(k7, (o_c,), jnp.float32) * 0.1
    y_dec2 = block_B_forward(x, w_dec2, b_dec2, dec=True, p_tile=128)
    jax.block_until_ready(y_dec2)

    # Validate against the pure-JAX reference (the reference includes the conv
    # bias, which cancels under InstanceNorm(affine=False); the kernel uses that).
    r_enc = _ref_block_B(x, w_enc, b_enc, dec=False)
    r_dec = _ref_block_B(y_enc, w_dec, b_dec, dec=True)
    r_dec2 = _ref_block_B(x, w_dec2, b_dec2, dec=True)
    assert y_enc.shape == (N, o_c, H // 2, W // 2)
    assert y_dec.shape == (N, i_c, H, W)
    assert y_dec2.shape == (N, o_c, 2 * H, 2 * W)
    assert jnp.allclose(y_enc, r_enc, atol=1e-3, rtol=1e-3)
    assert jnp.allclose(y_dec, r_dec, atol=1e-3, rtol=1e-3)
    assert jnp.allclose(y_dec2, r_dec2, atol=1e-3, rtol=1e-3)

    # bf16 matmul inputs (f32 accumulation + f32 InstanceNorm stats, bf16
    # intermediate), valid on v5e/v6e/v7x; looser tolerance.
    y_enc_bf16 = block_B_forward(x, w_enc, b_enc, dec=False, p_tile=128,
                                 compute_dtype=jnp.bfloat16)
    jax.block_until_ready(y_enc_bf16)
    assert jnp.allclose(y_enc_bf16, r_enc, atol=7e-2, rtol=7e-2)

    print("KERNEL_OK")
</pallas_src>

<mosaic_0001>
module attributes {stable_mosaic.version = 11 : i64} {
  func.func @kernel(%arg0: i32, %arg1: i32, %arg2: memref<1x16x128xf32, #tpu.memory_space<vmem>>, %arg3: memref<1x16x128xf32, #tpu.memory_space<vmem>>, %arg4: memref<8x16xf32, #tpu.memory_space<vmem>>, %arg5: memref<8x16xf32, #tpu.memory_space<vmem>>, %arg6: memref<8x16xf32, #tpu.memory_space<vmem>>, %arg7: memref<8x16xf32, #tpu.memory_space<vmem>>, %arg8: memref<1x8x128xf32, #tpu.memory_space<vmem>>, %arg9: memref<1x1x8x2xf32, #tpu.memory_space<vmem>>, %arg10: memref<8x128xf32, #tpu.memory_space<vmem>>) attributes {dimension_semantics = [#tpu.dimension_semantics<parallel>, #tpu.dimension_semantics<parallel>], iteration_bounds = array<i64: 2, 1>, scalar_prefetch = 0 : i64, scratch_operands = 1 : i64, tpu.core_type = #tpu.core_type<tc>, window_params = [{transform_indices = @transform_0, window_bounds = array<i64: 1, 16, 128>}, {transform_indices = @transform_1, window_bounds = array<i64: 1, 16, 128>}, {pipeline_mode = #tpu.pipeline_mode<synchronous>, transform_indices = @transform_2, window_bounds = array<i64: 8, 16>}, {pipeline_mode = #tpu.pipeline_mode<synchronous>, transform_indices = @transform_3, window_bounds = array<i64: 8, 16>}, {pipeline_mode = #tpu.pipeline_mode<synchronous>, transform_indices = @transform_4, window_bounds = array<i64: 8, 16>}, {pipeline_mode = #tpu.pipeline_mode<synchronous>, transform_indices = @transform_5, window_bounds = array<i64: 8, 16>}, {transform_indices = @transform_6, window_bounds = array<i64: 1, 8, 128>}, {transform_indices = @transform_7, window_bounds = array<i64: 1, 1, 8, 2>}]} {
    %c0 = arith.constant 0 : index
    %c0_0 = arith.constant 0 : index
    %c0_1 = arith.constant 0 : index
    %0 = vector.load %arg2[%c0, %c0_0, %c0_1] : memref<1x16x128xf32, #tpu.memory_space<vmem>>, vector<1x16x128xf32>
    %1 = vector.shape_cast %0 : vector<1x16x128xf32> to vector<16x128xf32>
    %c0_2 = arith.constant 0 : index
    %c0_3 = arith.constant 0 : index
    %c0_4 = arith.constant 0 : index
    %2 = vector.load %arg3[%c0_2, %c0_3, %c0_4] : memref<1x16x128xf32, #tpu.memory_space<vmem>>, vector<1x16x128xf32>
    %3 = vector.shape_cast %2 : vector<1x16x128xf32> to vector<16x128xf32>
    %4 = tpu.concatenate %1, %3 in 1 : vector<16x128xf32>, vector<16x128xf32> -> vector<16x256xf32>
    %c0_5 = arith.constant 0 : index
    %c0_6 = arith.constant 0 : index
    %5 = vector.load %arg4[%c0_5, %c0_6] : memref<8x16xf32, #tpu.memory_space<vmem>>, vector<8x16xf32>
    %6 = vector.extract_strided_slice %4 {offsets = [0, 0], sizes = [16, 128], strides = [1, 1]} : vector<16x256xf32> to vector<16x128xf32>
    %cst = arith.constant dense<0.000000e+00> : vector<8x128xf32>
    %7 = tpu.matmul %5, %6, %cst {dimension_numbers = #tpu.dot_dimension_numbers<[1], [0], [0], [1], [0, 0, 1, 1], [], []>} : vector<8x16xf32>, vector<16x128xf32>, vector<8x128xf32> -> vector<8x128xf32>
    %c0_7 = arith.constant 0 : index
    %c0_8 = arith.constant 0 : index
    %8 = vector.load %arg10[%c0_7, %c0_8] : memref<8x128xf32, #tpu.memory_space<vmem>>, vector<8x128xf32>
    tpu.vector_store %arg10[%c0_7, %c0_8], %7 {strides = array<i32>} : memref<8x128xf32, #tpu.memory_space<vmem>>, vector<8x128xf32>,
    %c0_9 = arith.constant 0 : index
    %c0_10 = arith.constant 0 : index
    %9 = vector.load %arg10[%c0_9, %c0_10] : memref<8x128xf32, #tpu.memory_space<vmem>>, vector<8x128xf32>
    %c0_11 = arith.constant 0 : index
    %c0_12 = arith.constant 0 : index
    %10 = vector.load %arg5[%c0_11, %c0_12] : memref<8x16xf32, #tpu.memory_space<vmem>>, vector<8x16xf32>
    %11 = vector.extract_strided_slice %4 {offsets = [0, 1], sizes = [16, 128], strides = [1, 1]} : vector<16x256xf32> to vector<16x128xf32>
    %cst_13 = arith.constant dense<0.000000e+00> : vector<8x128xf32>
    %12 = tpu.matmul %10, %11, %cst_13 {dimension_numbers = #tpu.dot_dimension_numbers<[1], [0], [0], [1], [0, 0, 1, 1], [], []>} : vector<8x16xf32>, vector<16x128xf32>, vector<8x128xf32> -> vector<8x128xf32>
    %13 = arith.addf %9, %12 : vector<8x128xf32>
    %c0_14 = arith.constant 0 : index
    %c0_15 = arith.constant 0 : index
    %14 = vector.load %arg10[%c0_14, %c0_15] : memref<8x128xf32, #tpu.memory_space<vmem>>, vector<8x128xf32>
    tpu.vector_store %arg10[%c0_14, %c0_15], %13 {strides = array<i32>} : memref<8x128xf32, #tpu.memory_space<vmem>>, vector<8x128xf32>,
    %c0_16 = arith.constant 0 : index
    %c0_17 = arith.constant 0 : index
    %15 = vector.load %arg10[%c0_16, %c0_17] : memref<8x128xf32, #tpu.memory_space<vmem>>, vector<8x128xf32>
    %c0_18 = arith.constant 0 : index
    %c0_19 = arith.constant 0 : index
    %16 = vector.load %arg6[%c0_18, %c0_19] : memref<8x16xf32, #tpu.memory_space<vmem>>, vector<8x16xf32>
    %17 = vector.extract_strided_slice %4 {offsets = [0, 9], sizes = [16, 128], strides = [1, 1]} : vector<16x256xf32> to vector<16x128xf32>
    %cst_20 = arith.constant dense<0.000000e+00> : vector<8x128xf32>
    %18 = tpu.matmul %16, %17, %cst_20 {dimension_numbers = #tpu.dot_dimension_numbers<[1], [0], [0], [1], [0, 0, 1, 1], [], []>} : vector<8x16xf32>, vector<16x128xf32>, vector<8x128xf32> -> vector<8x128xf32>
    %19 = arith.addf %15, %18 : vector<8x128xf32>
    %c0_21 = arith.constant 0 : index
    %c0_22 = arith.constant 0 : index
    %20 = vector.load %arg10[%c0_21, %c0_22] : memref<8x128xf32, #tpu.memory_space<vmem>>, vector<8x128xf32>
    tpu.vector_store %arg10[%c0_21, %c0_22], %19 {strides = array<i32>} : memref<8x128xf32, #tpu.memory_space<vmem>>, vector<8x128xf32>,
    %c0_23 = arith.constant 0 : index
    %c0_24 = arith.constant 0 : index
    %21 = vector.load %arg10[%c0_23, %c0_24] : memref<8x128xf32, #tpu.memory_space<vmem>>, vector<8x128xf32>
    %c0_25 = arith.constant 0 : index
    %c0_26 = arith.constant 0 : index
    %22 = vector.load %arg7[%c0_25, %c0_26] : memref<8x16xf32, #tpu.memory_space<vmem>>, vector<8x16xf32>
    %23 = vector.extract_strided_slice %4 {offsets = [0, 10], sizes = [16, 128], strides = [1, 1]} : vector<16x256xf32> to vector<16x128xf32>
    %cst_27 = arith.constant dense<0.000000e+00> : vector<8x128xf32>
    %24 = tpu.matmul %22, %23, %cst_27 {dimension_numbers = #tpu.dot_dimension_numbers<[1], [0], [0], [1], [0, 0, 1, 1], [], []>} : vector<8x16xf32>, vector<16x128xf32>, vector<8x128xf32> -> vector<8x128xf32>
    %25 = arith.addf %21, %24 : vector<8x128xf32>
    %c0_28 = arith.constant 0 : index
    %c0_29 = arith.constant 0 : index
    %26 = vector.load %arg10[%c0_28, %c0_29] : memref<8x128xf32, #tpu.memory_space<vmem>>, vector<8x128xf32>
    tpu.vector_store %arg10[%c0_28, %c0_29], %25 {strides = array<i32>} : memref<8x128xf32, #tpu.memory_space<vmem>>, vector<8x128xf32>,
    %c0_30 = arith.constant 0 : index
    %c0_31 = arith.constant 0 : index
    %27 = vector.load %arg10[%c0_30, %c0_31] : memref<8x128xf32, #tpu.memory_space<vmem>>, vector<8x128xf32>
    %c0_32 = arith.constant 0 : index
    %c0_33 = arith.constant 0 : index
    %c0_34 = arith.constant 0 : index
    %28 = vector.load %arg8[%c0_32, %c0_33, %c0_34] : memref<1x8x128xf32, #tpu.memory_space<vmem>>, vector<1x8x128xf32>
    %29 = vector.shape_cast %28 : vector<1x8x128xf32> to vector<8x128xf32>
    %30 = vector.shape_cast %27 : vector<8x128xf32> to vector<1x8x128xf32>
    tpu.vector_store %arg8[%c0_32, %c0_33, %c0_34], %30 {strides = array<i32>} : memref<1x8x128xf32, #tpu.memory_space<vmem>>, vector<1x8x128xf32>,
    %31 = tpu.iota {dimensions = array<i32: 1>} : vector<1x128xi32>
    %c128_i32 = arith.constant 128 : i32
    %32 = arith.muli %arg1, %c128_i32 : i32
    %33 = vector.broadcast %32 : i32 to vector<1x128xi32>
    %34 = arith.addi %31, %33 : vector<1x128xi32>
    %35 = arith.sitofp %34 : vector<1x128xi32> to vector<1x128xf32>
    %cst_35 = arith.constant 9.000000e+00 : f32
    %36 = vector.broadcast %cst_35 : f32 to vector<1x128xf32>
    %37 = arith.divf %35, %36 : vector<1x128xf32>
    %38 = math.floor %37 : vector<1x128xf32>
    %cst_36 = arith.constant 9.000000e+00 : f32
    %39 = vector.broadcast %cst_36 : f32 to vector<1x128xf32>
    %40 = arith.mulf %38, %39 : vector<1x128xf32>
    %41 = arith.subf %35, %40 : vector<1x128xf32>
    %c72_i32 = arith.constant 72 : i32
    %42 = vector.broadcast %c72_i32 : i32 to vector<1x128xi32>
    %43 = arith.cmpi slt, %34, %42 : vector<1x128xi32>
    %cst_37 = arith.constant 8.000000e+00 : f32
    %44 = vector.broadcast %cst_37 : f32 to vector<1x128xf32>
    %45 = arith.cmpf olt, %41, %44 : vector<1x128xf32>
    %46 = arith.andi %43, %45 : vector<1x128xi1>
    %cst_38 = arith.constant 1.000000e+00 : f32
    %cst_39 = arith.constant 0.000000e+00 : f32
    %47 = vector.broadcast %cst_38 : f32 to vector<1x128xf32>
    %48 = vector.broadcast %cst_39 : f32 to vector<1x128xf32>
    %49 = arith.select %46, %47, %48 : vector<1x128xi1>, vector<1x128xf32>
    %50 = vector.broadcast %49 : vector<1x128xf32> to vector<8x128xf32>
    %51 = arith.mulf %27, %50 : vector<8x128xf32>
    %cst_40 = arith.constant dense<0.000000e+00> : vector<8xf32>
    %52 = vector.multi_reduction <add>, %51, %cst_40 [1] : vector<8x128xf32> to vector<8xf32>
    %53 = vector.shape_cast %52 : vector<8xf32> to vector<8x1xf32>
    %c0_41 = arith.constant 0 : index
    %c0_42 = arith.constant 0 : index
    %c0_43 = arith.constant 0 : index
    %c0_44 = arith.constant 0 : index
    %54 = vector.load %arg9[%c0_41, %c0_42, %c0_43, %c0_44] : memref<1x1x8x2xf32, #tpu.memory_space<vmem>>, vector<1x1x8x1xf32>
    %55 = vector.shape_cast %54 : vector<1x1x8x1xf32> to vector<8x1xf32>
    %56 = vector.shape_cast %53 : vector<8x1xf32> to vector<1x1x8x1xf32>
    tpu.vector_store %arg9[%c0_41, %c0_42, %c0_43, %c0_44], %56 {strides = array<i32>} : memref<1x1x8x2xf32, #tpu.memory_space<vmem>>, vector<1x1x8x1xf32>,
    %57 = arith.mulf %51, %51 : vector<8x128xf32>
    %cst_45 = arith.constant dense<0.000000e+00> : vector<8xf32>
    %58 = vector.multi_reduction <add>, %57, %cst_45 [1] : vector<8x128xf32> to vector<8xf32>
    %59 = vector.shape_cast %58 : vector<8xf32> to vector<8x1xf32>
    %c0_46 = arith.constant 0 : index
    %c0_47 = arith.constant 0 : index
    %c0_48 = arith.constant 0 : index
    %c1 = arith.constant 1 : index
    %60 = vector.load %arg9[%c0_46, %c0_47, %c0_48, %c1] : memref<1x1x8x2xf32, #tpu.memory_space<vmem>>, vector<1x1x8x1xf32>
    %61 = vector.shape_cast %60 : vector<1x1x8x1xf32> to vector<8x1xf32>
    %62 = vector.shape_cast %59 : vector<8x1xf32> to vector<1x1x8x1xf32>
    tpu.vector_store %arg9[%c0_46, %c0_47, %c0_48, %c1], %62 {strides = array<i32>} : memref<1x1x8x2xf32, #tpu.memory_space<vmem>>, vector<1x1x8x1xf32>,
    return
  }
  func.func @transform_0(%arg0: i32, %arg1: i32) -> (i32, i32, i32) {
    %c0_i32 = arith.constant 0 : i32
    %c0_i32_0 = arith.constant 0 : i32
    return %arg0, %c0_i32, %arg1 : i32, i32, i32
  }
  func.func @transform_1(%arg0: i32, %arg1: i32) -> (i32, i32, i32) {
    %c1_i32 = arith.constant 1 : i32
    %0 = arith.addi %arg1, %c1_i32 : i32
    %c1_i32_0 = arith.constant 1 : i32
    %1 = arith.muli %0, %c1_i32_0 : i32
    %c0_i32 = arith.constant 0 : i32
    %2 = arith.minsi %1, %c0_i32 : i32
    %c0_i32_1 = arith.constant 0 : i32
    %c0_i32_2 = arith.constant 0 : i32
    return %arg0, %c0_i32_1, %2 : i32, i32, i32
  }
  func.func @transform_2(%arg0: i32, %arg1: i32) -> (i32, i32) {
    %c0_i32 = arith.constant 0 : i32
    %c0_i32_0 = arith.constant 0 : i32
    %c0_i32_1 = arith.constant 0 : i32
    return %c0_i32, %c0_i32_0 : i32, i32
  }
  func.func @transform_3(%arg0: i32, %arg1: i32) -> (i32, i32) {
    %c0_i32 = arith.constant 0 : i32
    %c0_i32_0 = arith.constant 0 : i32
    %c0_i32_1 = arith.constant 0 : i32
    return %c0_i32, %c0_i32_0 : i32, i32
  }
  func.func @transform_4(%arg0: i32, %arg1: i32) -> (i32, i32) {
    %c0_i32 = arith.constant 0 : i32
    %c0_i32_0 = arith.constant 0 : i32
    %c0_i32_1 = arith.constant 0 : i32
    return %c0_i32, %c0_i32_0 : i32, i32
  }
  func.func @transform_5(%arg0: i32, %arg1: i32) -> (i32, i32) {
    %c0_i32 = arith.constant 0 : i32
    %c0_i32_0 = arith.constant 0 : i32
    %c0_i32_1 = arith.constant 0 : i32
    return %c0_i32, %c0_i32_0 : i32, i32
  }
  func.func @transform_6(%arg0: i32, %arg1: i32) -> (i32, i32, i32) {
    %c0_i32 = arith.constant 0 : i32
    %c0_i32_0 = arith.constant 0 : i32
    return %arg0, %c0_i32, %arg1 : i32, i32, i32
  }
  func.func @transform_7(%arg0: i32, %arg1: i32) -> (i32, i32, i32, i32) {
    %c0_i32 = arith.constant 0 : i32
    %c0_i32_0 = arith.constant 0 : i32
    %c0_i32_1 = arith.constant 0 : i32
    return %arg0, %arg1, %c0_i32, %c0_i32_0 : i32, i32, i32, i32
  }
}

</mosaic_0001>

<llo_original>
// kernel: tpu_custom_call.1
$region0: #{tpu_custom_call.1}
  #allocation0 [shape = 'u32[]', space=smem, size = 0x4, offset = 0x4, fixed_abs, tag = 'smem constant byte address 0x4 - core index']
  #allocation1 [shape = 'u32[72,128]{1,0:T(1,128)}', space=vmem, size = 0x9000, scoped, tag = 'internal scratch']
  #allocation2 [shape = 'f32[8,128]{1,0:T(8,128)}', space=vmem, size = 0x1000, scoped, tag = 'scratch operand']
  %s0 = inlined_call_operand.hbm [shape: f32[2,16,128], index: 0, kind: input, shape index: {}]
  %s1 = inlined_call_operand.hbm [shape: f32[2,16,128], index: 1, kind: input, shape index: {}]
  %s2 = inlined_call_operand.hbm [shape: f32[8,16], index: 2, kind: input, shape index: {}]
  %s3 = inlined_call_operand.hbm [shape: f32[8,16], index: 3, kind: input, shape index: {}]
  %s4 = inlined_call_operand.hbm [shape: f32[8,16], index: 4, kind: input, shape index: {}]
  %s5 = inlined_call_operand.hbm [shape: f32[8,16], index: 5, kind: input, shape index: {}]
  %s6 = inlined_call_operand.hbm [shape: f32[2,8,128], index: 6, kind: output, shape index: {0}]
  %s7 = inlined_call_operand.vmem [shape: f32[2,1,8,2], index: 7, kind: output, shape index: {1}]
  %8 = xla_tuple %s6, %s7
  %s9 = sld [smem:[#allocation0]]
  $region89: #{tpu_custom_call.1} parent=0
    _
  %s11 = ssub.s32 1, %s9
  %s12 = scalar_select 0, %s11, %s9
  $region1: #{tpu_custom_call.1} parent=0
    #allocation3 [shape = 'u8[16384]{0}', space=vmem, size = 0x4000, scoped, tag = 'input window, operand 0']
    #allocation4 [shape = 's32[2]{0}', space=sflag, size = 0x8, scoped, tag = 'scoped memory for tpu_custom_call.1']
    #allocation5 [shape = 's32[2]{0}', space=sflag, size = 0x8, scoped, tag = 'scoped memory for tpu_custom_call.1']
    #allocation6 [shape = 'u8[16384]{0}', space=vmem, size = 0x4000, scoped, tag = 'input window, operand 1']
    #allocation7 [shape = 's32[2]{0}', space=sflag, size = 0x8, scoped, tag = 'scoped memory for tpu_custom_call.1']
    #allocation8 [shape = 'u8[4096]{0}', space=vmem, size = 0x1000, scoped, tag = 'input window, operand 2, single buffered']
    #allocation9 [shape = 'u8[4096]{0}', space=vmem, size = 0x1000, scoped, tag = 'input window, operand 3, single buffered']
    #allocation10 [shape = 's32[1]{0}', space=sflag, size = 0x4, scoped, tag = 'scoped memory for tpu_custom_call.1']
    #allocation11 [shape = 'u8[4096]{0}', space=vmem, size = 0x1000, scoped, tag = 'input window, operand 4, single buffered']
    #allocation12 [shape = 'u8[4096]{0}', space=vmem, size = 0x1000, scoped, tag = 'input window, operand 5, single buffered']
    #allocation13 [shape = 's32[1]{0}', space=sflag, size = 0x4, scoped, tag = 'scoped memory for tpu_custom_call.1']
    #allocation14 [shape = 'u8[8192]{0}', space=vmem, size = 0x2000, scoped, tag = 'output window, operand 0']
    %13 = vsyncpa [#allocation4], 0
    %s14 = scalar_lea.sflag [#allocation4], 1
    %15 = vsyncpa %s14, 0
    %16 = vsyncpa [#allocation7], 0
    %s17 = scalar_lea.sflag [#allocation7], 1
    %18 = vsyncpa %s17, 0
    %19 = vsyncpa [#allocation10], 0
    %20 = vsyncpa [#allocation13], 0
    %21 = vsyncpa [#allocation5], 0
    %s22 = scalar_lea.sflag [#allocation5], 1
    %23 = vsyncpa %s22, 0
    loop: start=0, step=1, limit=4
    $region2: #{tpu_custom_call.1} parent=1 // loop_pre_header
      _
    $region3: #{tpu_custom_call.1} parent=1 // loop_header
      %s25 = sphi 0, %s29
      %p26 = scmp.ge.s32.totalorder %s25, 4
      %s32 = sphi 0, %s44
      %s33 = sphi 0, %s40
      %s34 = sphi 0, %s32
      %s35 = sphi 0, %s33
      %s36 = sphi 0, %s34
      %s37 = sphi 0, %s35
      %s49 = sphi 0, %s51
      %s52 = sphi 0, %s49
      %s53 = sphi 0, %s52
      %s69 = sphi 0, %s53
      %s83 = sphi 0, %s85
      %s86 = sphi 0, %s83
      %s87 = sphi 0, %s86
      %s103 = sphi 0, %s87
      %s107 = sphi 0, %s107
      %s109 = sphi 0, %s107
      %s110 = sphi 0, %s109
      %s124 = sphi 0, %s110
      %s128 = sphi 0, %s128
      %s130 = sphi 0, %s128
      %s131 = sphi 0, %s130
      %s145 = sphi 0, %s131
      %s149 = sphi 0, %s149
      %s151 = sphi 0, %s149
      %s152 = sphi 0, %s151
      %s166 = sphi 0, %s152
      %s170 = sphi 0, %s170
      %s172 = sphi 0, %s170
      %s173 = sphi 0, %s172
      %s187 = sphi 0, %s173
      %s195 = sphi 0, %s197
      %s198 = sphi 0, %s195
      %s199 = sphi 0, %s198
      %s215 = sphi 0, %s199
      %s223 = sphi 0, %s225
      %s226 = sphi 0, %s223
      %s227 = sphi 0, %s226
      %s243 = sphi 0, %s227
    $region4: #{tpu_custom_call.1} parent=1 // loop_header_branch
      %28 = sbr.rel (%p26) target = $region8
    $region5: #{tpu_custom_call.1} parent=1 // loop_body
      %s30 = ssub.s32 %s25, 1
      %s31 = ssub.s32 %s25, 2
      %s38 = sadd.s32 1, %s33
      %p39 = scmp.ge.s32.totalorder %s38, 1
      %s40 = scalar_select %p39, 0, %s38
      %s41 = sadd.s32 1, %s32
      %s42 = scalar_select %p39, %s41, %s32
      %p43 = scmp.ge.s32.totalorder %s42, 2
      %s44 = scalar_select %p43, 0, %s42
      %s45 = ssub.s32 %s32, %s44
      %s46 = ssub.s32 %s33, %s40
      %s47 = sor.u32 %s45, %s46
      %p48 = scmp.eq.s32.totalorder %s47, 0
      %s50 = sadd.s32 %s49, 1
      %s51 = scalar_select %p48, %s49, %s50
      %p54 = pneg %p48
      %p55 = scmp.eq.s32.totalorder %s25, 1
      %p56 = por %p54, %p55
      %p57 = scmp.ne.s32.totalorder %s49, %s52
      %p58 = scmp.eq.s32.totalorder %s25, 0
      %p59 = por %p57, %p58
      %p60 = scmp.ne.s32.totalorder %s49, %s52
      %p61 = scmp.eq.s32.totalorder %s30, 1
      %p62 = por %p60, %p61
      %p63 = scmp.ne.s32.totalorder %s52, %s53
      %p64 = scmp.eq.s32.totalorder %s30, 0
      %p65 = por %p63, %p64
      %p66 = scmp.ne.s32.totalorder %s52, %s53
      %p67 = scmp.eq.s32.totalorder %s31, 1
      %p68 = por %p66, %p67
      %p70 = scmp.ne.s32.totalorder %s53, %s69
      %p71 = scmp.eq.s32.totalorder %s31, 0
      %p72 = por %p70, %p71
      %s73 = sadd.s32 %s33, 1
      %p74 = scmp.lt.s32.totalorder %s73, 0
      %s75 = scalar_select %p74, %s73, 0
      %s76 = sadd.s32 %s40, 1
      %p77 = scmp.lt.s32.totalorder %s76, 0
      %s78 = scalar_select %p77, %s76, 0
      %s79 = ssub.s32 %s32, %s44
      %s80 = ssub.s32 %s75, %s78
      %s81 = sor.u32 %s79, %s80
      %p82 = scmp.eq.s32.totalorder %s81, 0
      %s84 = sadd.s32 %s83, 1
      %s85 = scalar_select %p82, %s83, %s84
      %p88 = pneg %p82
      %p89 = scmp.eq.s32.totalorder %s25, 1
      %p90 = por %p88, %p89
      %p91 = scmp.ne.s32.totalorder %s83, %s86
      %p92 = scmp.eq.s32.totalorder %s25, 0
      %p93 = por %p91, %p92
      %p94 = scmp.ne.s32.totalorder %s83, %s86
      %p95 = scmp.eq.s32.totalorder %s30, 1
      %p96 = por %p94, %p95
      %p97 = scmp.ne.s32.totalorder %s86, %s87
      %p98 = scmp.eq.s32.totalorder %s30, 0
      %p99 = por %p97, %p98
      %p100 = scmp.ne.s32.totalorder %s86, %s87
      %p101 = scmp.eq.s32.totalorder %s31, 1
      %p102 = por %p100, %p101
      %p104 = scmp.ne.s32.totalorder %s87, %s103
      %p105 = scmp.eq.s32.totalorder %s31, 0
      %p106 = por %p104, %p105
      %s108 = sadd.s32 %s107, 1
      %p111 = scmp.eq.s32.totalorder %s25, 1
      %p112 = scmp.ne.s32.totalorder %s107, %s109
      %p113 = scmp.eq.s32.totalorder %s25, 0
      %p114 = por %p112, %p113
      %p115 = scmp.ne.s32.totalorder %s107, %s109
      %p116 = scmp.eq.s32.totalorder %s30, 1
      %p117 = por %p115, %p116
      %p118 = scmp.ne.s32.totalorder %s109, %s110
      %p119 = scmp.eq.s32.totalorder %s30, 0
      %p120 = por %p118, %p119
      %p121 = scmp.ne.s32.totalorder %s109, %s110
      %p122 = scmp.eq.s32.totalorder %s31, 1
      %p123 = por %p121, %p122
      %p125 = scmp.ne.s32.totalorder %s110, %s124
      %p126 = scmp.eq.s32.totalorder %s31, 0
      %p127 = por %p125, %p126
      %s129 = sadd.s32 %s128, 1
      %p132 = scmp.eq.s32.totalorder %s25, 1
      %p133 = scmp.ne.s32.totalorder %s128, %s130
      %p134 = scmp.eq.s32.totalorder %s25, 0
      %p135 = por %p133, %p134
      %p136 = scmp.ne.s32.totalorder %s128, %s130
      %p137 = scmp.eq.s32.totalorder %s30, 1
      %p138 = por %p136, %p137
      %p139 = scmp.ne.s32.totalorder %s130, %s131
      %p140 = scmp.eq.s32.totalorder %s30, 0
      %p141 = por %p139, %p140
      %p142 = scmp.ne.s32.totalorder %s130, %s131
      %p143 = scmp.eq.s32.totalorder %s31, 1
      %p144 = por %p142, %p143
      %p146 = scmp.ne.s32.totalorder %s131, %s145
      %p147 = scmp.eq.s32.totalorder %s31, 0
      %p148 = por %p146, %p147
      %s150 = sadd.s32 %s149, 1
      %p153 = scmp.eq.s32.totalorder %s25, 1
      %p154 = scmp.ne.s32.totalorder %s149, %s151
      %p155 = scmp.eq.s32.totalorder %s25, 0
      %p156 = por %p154, %p155
      %p157 = scmp.ne.s32.totalorder %s149, %s151
      %p158 = scmp.eq.s32.totalorder %s30, 1
      %p159 = por %p157, %p158
      %p160 = scmp.ne.s32.totalorder %s151, %s152
      %p161 = scmp.eq.s32.totalorder %s30, 0
      %p162 = por %p160, %p161
      %p163 = scmp.ne.s32.totalorder %s151, %s152
      %p164 = scmp.eq.s32.totalorder %s31, 1
      %p165 = por %p163, %p164
      %p167 = scmp.ne.s32.totalorder %s152, %s166
      %p168 = scmp.eq.s32.totalorder %s31, 0
      %p169 = por %p167, %p168
      %s171 = sadd.s32 %s170, 1
      %p174 = scmp.eq.s32.totalorder %s25, 1
      %p175 = scmp.ne.s32.totalorder %s170, %s172
      %p176 = scmp.eq.s32.totalorder %s25, 0
      %p177 = por %p175, %p176
      %p178 = scmp.ne.s32.totalorder %s170, %s172
      %p179 = scmp.eq.s32.totalorder %s30, 1
      %p180 = por %p178, %p179
      %p181 = scmp.ne.s32.totalorder %s172, %s173
      %p182 = scmp.eq.s32.totalorder %s30, 0
      %p183 = por %p181, %p182
      %p184 = scmp.ne.s32.totalorder %s172, %s173
      %p185 = scmp.eq.s32.totalorder %s31, 1
      %p186 = por %p184, %p185
      %p188 = scmp.ne.s32.totalorder %s173, %s187
      %p189 = scmp.eq.s32.totalorder %s31, 0
      %p190 = por %p188, %p189
      %s191 = ssub.s32 %s32, %s44
      %s192 = ssub.s32 %s33, %s40
      %s193 = sor.u32 %s191, %s192
      %p194 = scmp.eq.s32.totalorder %s193, 0
      %s196 = sadd.s32 %s195, 1
      %s197 = scalar_select %p194, %s195, %s196
      %p200 = pneg %p194
      %p201 = scmp.eq.s32.totalorder %s25, 1
      %p202 = por %p200, %p201
      %p203 = scmp.ne.s32.totalorder %s195, %s198
      %p204 = scmp.eq.s32.totalorder %s25, 0
      %p205 = por %p203, %p204
      %p206 = scmp.ne.s32.totalorder %s195, %s198
      %p207 = scmp.eq.s32.totalorder %s30, 1
      %p208 = por %p206, %p207
      %p209 = scmp.ne.s32.totalorder %s198, %s199
      %p210 = scmp.eq.s32.totalorder %s30, 0
      %p211 = por %p209, %p210
      %p212 = scmp.ne.s32.totalorder %s198, %s199
      %p213 = scmp.eq.s32.totalorder %s31, 1
      %p214 = por %p212, %p213
      %p216 = scmp.ne.s32.totalorder %s199, %s215
      %p217 = scmp.eq.s32.totalorder %s31, 0
      %p218 = por %p216, %p217
      %s219 = ssub.s32 %s32, %s44
      %s220 = ssub.s32 %s33, %s40
      %s221 = sor.u32 %s219, %s220
      %p222 = scmp.eq.s32.totalorder %s221, 0
      %s224 = sadd.s32 %s223, 1
      %s225 = scalar_select %p222, %s223, %s224
      %p228 = pneg %p222
      %p229 = scmp.eq.s32.totalorder %s25, 1
      %p230 = por %p228, %p229
      %p231 = scmp.ne.s32.totalorder %s223, %s226
      %p232 = scmp.eq.s32.totalorder %s25, 0
      %p233 = por %p231, %p232
      %p234 = scmp.ne.s32.totalorder %s223, %s226
      %p235 = scmp.eq.s32.totalorder %s30, 1
      %p236 = por %p234, %p235
      %p237 = scmp.ne.s32.totalorder %s226, %s227
      %p238 = scmp.eq.s32.totalorder %s30, 0
      %p239 = por %p237, %p238
      %p240 = scmp.ne.s32.totalorder %s226, %s227
      %p241 = scmp.eq.s32.totalorder %s31, 1
      %p242 = por %p240, %p241
      %p244 = scmp.ne.s32.totalorder %s227, %s243
      %p245 = scmp.eq.s32.totalorder %s31, 0
      %p246 = por %p244, %p245
      %p247 = scmp.le.s32.totalorder 1, %s25
      %p248 = scmp.lt.s32.totalorder %s25, 3
      %p249 = pnand %p247, %p248
      %p250 = pneg %p249
      // Predicated region
      $region9: #{tpu_custom_call.1} parent=5 // pred_check
        _
      $region10: #{tpu_custom_call.1} parent=5 // pred_check_branch
        %252 = sbr.rel (%p249) target = $region12
      $region11: #{tpu_custom_call.1} parent=5 // pred_region
        %s253 = ssub.s32 %s25, 1
        // Predicated region
        $region13: #{tpu_custom_call.1} parent=11 // pred_check
          %p254 = pneg %p120
        $region14: #{tpu_custom_call.1} parent=11 // pred_check_branch
          %256 = sbr.rel (%p254) target = $region16
        $region15: #{tpu_custom_call.1} parent=11 // pred_region
          %258 = vsyncadd [#allocation7], 0
          %s260 = sshll.u32 %s2, 4
          %s261 = int_to_ptr.hbm [resolvable:$true] %s260
          %s262 = sshll.u32 [#allocation8], 4
          %s263 = int_to_ptr.vmem [resolvable:$true] %s262
          %265 = dma.hbm_to_vmem [thread:$0]  %s261, 128, %s263, [#allocation7]
        $region16: #{tpu_custom_call.1} parent=11 // pred_fallthru
          _
        // Predicated region
        $region17: #{tpu_custom_call.1} parent=11 // pred_check
          %p266 = pneg %p141
        $region18: #{tpu_custom_call.1} parent=11 // pred_check_branch
          %268 = sbr.rel (%p266) target = $region20
        $region19: #{tpu_custom_call.1} parent=11 // pred_region
          %270 = vsyncadd [#allocation10], 0
          %s272 = sshll.u32 %s3, 4
          %s273 = int_to_ptr.hbm [resolvable:$true] %s272
          %s274 = sshll.u32 [#allocation9], 4
          %s275 = int_to_ptr.vmem [resolvable:$true] %s274
          %277 = dma.hbm_to_vmem [thread:$0]  %s273, 128, %s275, [#allocation10]
        $region20: #{tpu_custom_call.1} parent=11 // pred_fallthru
          _
        // Predicated region
        $region21: #{tpu_custom_call.1} parent=11 // pred_check
          %p278 = pneg %p162
        $region22: #{tpu_custom_call.1} parent=11 // pred_check_branch
          %280 = sbr.rel (%p278) target = $region24
        $region23: #{tpu_custom_call.1} parent=11 // pred_region
          %282 = vsyncadd [#allocation10], 0
          %s284 = sshll.u32 %s4, 4
          %s285 = int_to_ptr.hbm [resolvable:$true] %s284
          %s286 = sshll.u32 [#allocation11], 4
          %s287 = int_to_ptr.vmem [resolvable:$true] %s286
          %289 = dma.hbm_to_vmem [thread:$0]  %s285, 128, %s287, [#allocation10]
        $region24: #{tpu_custom_call.1} parent=11 // pred_fallthru
          _
        // Predicated region
        $region25: #{tpu_custom_call.1} parent=11 // pred_check
          %p290 = pneg %p183
        $region26: #{tpu_custom_call.1} parent=11 // pred_check_branch
          %292 = sbr.rel (%p290) target = $region28
        $region27: #{tpu_custom_call.1} parent=11 // pred_region
          %294 = vsyncadd [#allocation13], 0
          %s296 = sshll.u32 %s5, 4
          %s297 = int_to_ptr.hbm [resolvable:$true] %s296
          %s298 = sshll.u32 [#allocation12], 4
          %s299 = int_to_ptr.vmem [resolvable:$true] %s298
          %301 = dma.hbm_to_vmem [thread:$0]  %s297, 128, %s299, [#allocation13]
        $region28: #{tpu_custom_call.1} parent=11 // pred_fallthru
          _
      $region12: #{tpu_custom_call.1} parent=5 // pred_fallthru
        _
      %p302 = scmp.lt.s32.totalorder %s25, 2
      // Predicated region
      $region29: #{tpu_custom_call.1} parent=5 // pred_check
        %p303 = pneg %p302
      $region30: #{tpu_custom_call.1} parent=5 // pred_check_branch
        %305 = sbr.rel (%p303) target = $region32
      $region31: #{tpu_custom_call.1} parent=5 // pred_region
        // Predicated region
        $region33: #{tpu_custom_call.1} parent=31 // pred_check
          %p306 = pneg %p59
        $region34: #{tpu_custom_call.1} parent=31 // pred_check_branch
          %308 = sbr.rel (%p306) target = $region36
        $region35: #{tpu_custom_call.1} parent=31 // pred_region
          %s309 = sand.u32 %s49, 1
          %s310 = scalar_lea.sflag [#allocation4], %s309
          %s311 = sand.u32 %s49, 1
          %s312 = smul.addr %s311, 16
          %s313 = scalar_lea.vmem [#allocation3], %s312
          %315 = vsyncadd %s310, 0
          %s316 = smul.addr %s32, 2
          %s317 = sadd.s32 %s33, %s316
          %s318 = smul.addr %s317, 8
          %s319 = scalar_lea.hbm %s0, %s318
          %s320 = sshll.u32 %s319, 4
          %s321 = int_to_ptr.hbm [resolvable:$true] %s320
          %s322 = sshll.u32 %s313, 4
          %s323 = int_to_ptr.vmem [resolvable:$true] %s322
          %328 = dma.hbm_to_vmem [thread:$0]  %s321, 256, %s323, %s310, 128, 128, 8
        $region36: #{tpu_custom_call.1} parent=31 // pred_fallthru
          _
        // Predicated region
        $region37: #{tpu_custom_call.1} parent=31 // pred_check
          %p329 = pneg %p93
        $region38: #{tpu_custom_call.1} parent=31 // pred_check_branch
          %331 = sbr.rel (%p329) target = $region40
        $region39: #{tpu_custom_call.1} parent=31 // pred_region
          %s332 = sand.u32 %s25, 1
          %s333 = scalar_lea.sflag [#allocation7], %s332
          %s334 = sand.u32 %s83, 1
          %s335 = smul.addr %s334, 16
          %s336 = scalar_lea.vmem [#allocation6], %s335
          %s337 = sadd.s32 %s33, 1
          %p338 = scmp.lt.s32.totalorder %s337, 0
          %s339 = scalar_select %p338, %s337, 0
          %341 = vsyncadd %s333, 0
          %s342 = smul.addr %s32, 2
          %s343 = sadd.s32 %s339, %s342
          %s344 = smul.addr %s343, 8
          %s345 = scalar_lea.hbm %s1, %s344
          %s346 = sshll.u32 %s345, 4
          %s347 = int_to_ptr.hbm [resolvable:$true] %s346
          %s348 = sshll.u32 %s336, 4
          %s349 = int_to_ptr.vmem [resolvable:$true] %s348
          %354 = dma.hbm_to_vmem [thread:$0]  %s347, 256, %s349, %s333, 128, 128, 8
        $region40: #{tpu_custom_call.1} parent=31 // pred_fallthru
          _
      $region32: #{tpu_custom_call.1} parent=5 // pred_fallthru
        _
      %p355 = scmp.le.s32.totalorder 1, %s25
      %p356 = scmp.lt.s32.totalorder %s25, 3
      %p357 = pnand %p355, %p356
      %p358 = pneg %p357
      // Predicated region
      $region41: #{tpu_custom_call.1} parent=5 // pred_check
        _
      $region42: #{tpu_custom_call.1} parent=5 // pred_check_branch
        %360 = sbr.rel (%p357) target = $region44
      $region43: #{tpu_custom_call.1} parent=5 // pred_region
        %s361 = ssub.s32 %s25, 1
        %s362 = sand.u32 %s52, 1
        %s363 = scalar_lea.sflag [#allocation4], %s362
        %s364 = sand.u32 %s52, 1
        %s365 = smul.addr %s364, 16
        %s366 = scalar_lea.vmem [#allocation3], %s365
        // Predicated region
        $region45: #{tpu_custom_call.1} parent=43 // pred_check
          %p367 = pneg %p65
        $region46: #{tpu_custom_call.1} parent=43 // pred_check_branch
          %369 = sbr.rel (%p367) target = $region48
        $region47: #{tpu_custom_call.1} parent=43 // pred_region
          %371 = dma.done %s363, 256
        $region48: #{tpu_custom_call.1} parent=43 // pred_fallthru
          _
        %s372 = sand.u32 %s30, 1
        %s373 = scalar_lea.sflag [#allocation7], %s372
        %s374 = sand.u32 %s86, 1
        %s375 = smul.addr %s374, 16
        %s376 = scalar_lea.vmem [#allocation6], %s375
        // Predicated region
        $region49: #{tpu_custom_call.1} parent=43 // pred_check
          %p377 = pneg %p99
        $region50: #{tpu_custom_call.1} parent=43 // pred_check_branch
          %379 = sbr.rel (%p377) target = $region52
        $region51: #{tpu_custom_call.1} parent=43 // pred_region
          %381 = dma.done %s373, 256
        $region52: #{tpu_custom_call.1} parent=43 // pred_fallthru
          _
        // Predicated region
        $region53: #{tpu_custom_call.1} parent=43 // pred_check
          %p382 = pneg %p120
        $region54: #{tpu_custom_call.1} parent=43 // pred_check_branch
          %384 = sbr.rel (%p382) target = $region56
        $region55: #{tpu_custom_call.1} parent=43 // pred_region
          %386 = dma.done [#allocation7], 128
        $region56: #{tpu_custom_call.1} parent=43 // pred_fallthru
          _
        // Predicated region
        $region57: #{tpu_custom_call.1} parent=43 // pred_check
          %p387 = pneg %p141
        $region58: #{tpu_custom_call.1} parent=43 // pred_check_branch
          %389 = sbr.rel (%p387) target = $region60
        $region59: #{tpu_custom_call.1} parent=43 // pred_region
          %391 = dma.done [#allocation10], 128
        $region60: #{tpu_custom_call.1} parent=43 // pred_fallthru
          _
        // Predicated region
        $region61: #{tpu_custom_call.1} parent=43 // pred_check
          %p392 = pneg %p162
        $region62: #{tpu_custom_call.1} parent=43 // pred_check_branch
          %394 = sbr.rel (%p392) target = $region64
        $region63: #{tpu_custom_call.1} parent=43 // pred_region
          %396 = dma.done [#allocation10], 128
        $region64: #{tpu_custom_call.1} parent=43 // pred_fallthru
          _
        // Predicated region
        $region65: #{tpu_custom_call.1} parent=43 // pred_check
          %p397 = pneg %p183
        $region66: #{tpu_custom_call.1} parent=43 // pred_check_branch
          %399 = sbr.rel (%p397) target = $region68
        $region67: #{tpu_custom_call.1} parent=43 // pred_region
          %401 = dma.done [#allocation13], 128
        $region68: #{tpu_custom_call.1} parent=43 // pred_fallthru
          _
        %s402 = sand.u32 %s52, 1
        %s403 = scalar_lea.sflag [#allocation4], %s402
        %s404 = sand.u32 %s52, 1
        %s405 = smul.addr %s404, 16
        %s406 = scalar_lea.vmem [#allocation3], %s405
        %p407 = pneg %p65
        %p408 = pneg %p62
        %s409 = sand.u32 %s30, 1
        %s410 = scalar_lea.sflag [#allocation7], %s409
        %s411 = sand.u32 %s86, 1
        %s412 = smul.addr %s411, 16
        %s413 = scalar_lea.vmem [#allocation6], %s412
        %p414 = pneg %p99
        %p415 = pneg %p96
        %p416 = pneg %p120
        %p417 = pneg %p117
        %p418 = pneg %p141
        %p419 = pneg %p138
        %p420 = pneg %p162
        %p421 = pneg %p159
        %p422 = pneg %p183
        %p423 = pneg %p180
        %p424 = pneg %p211
        %p425 = pneg %p208
        %s426 = sand.u32 %s198, 1
        %s427 = scalar_lea.sflag [#allocation5], %s426
        %s428 = sand.u32 %s198, 1
        %s429 = smul.addr %s428, 8
        %s430 = scalar_lea.vmem [#allocation14], %s429
        %p431 = pneg %p239
        %p432 = pneg %p236
        %p433 = scmp.lt.s32.totalorder %s34, 1
        %s434 = scalar_select %p433, %s34, 1
        %p435 = scmp.lt.s32.totalorder %s35, 0
        %s436 = scalar_select %p435, %s35, 0
        %s437 = sadd.s32 %s436, %s434
        %s438 = smul.addr %s437, 8
        %s439 = scalar_lea.vmem %s7, %s438
        %s440 = sadd.s32 %s35, 1
        %p441 = scmp.lt.s32.totalorder %s440, 0
        %s442 = scalar_select %p441, %s440, 0
        %p443 = scmp.lt.s32.totalorder %s34, 1
        %s444 = scalar_select %p443, %s34, 1
        %p445 = scmp.lt.s32.totalorder %s35, 0
        %s446 = scalar_select %p445, %s35, 0
        %s447 = sadd.s32 %s446, %s444
        %s448 = smul.addr %s447, 8
        %s449 = scalar_lea.vmem %s7, %s448
        %v450 = vld [vmem:[%s366] sm:$0xff]
        %v451 = vld [vmem:[%s366 + $0x8] sm:$0xff]
        %v452 = vld [vmem:[%s376] sm:$0xff]
        %v453 = vld [vmem:[%s376 + $0x8] sm:$0xff]
        %v454 = vld [vmem:[#allocation8] sm:$0xff]
        %vm455 = vcmask 130048
        %v457 = vsel %vm455, %v454, 0
        %459 = vmatpush.msra.mxu0 0.0
        %460 = vmatpush.msra.mxu0 0.0
        %461 = vmatpush.msra.mxu0 0.0
        %462 = vmatpush.msra.mxu0 0.0
        %463 = vmatpush.msra.mxu0 0.0
        %464 = vmatpush.msra.mxu0 0.0
        %465 = vmatpush.msra.mxu0 0.0
        %466 = vmatpush.msra.mxu0 0.0
        %467 = vmatpush.msra.mxu0 0.0
        %468 = vmatpush.msra.mxu0 0.0
        %469 = vmatpush.msra.mxu0 0.0
        %470 = vmatpush.msra.mxu0 0.0
        %471 = vmatpush.msra.mxu0 0.0
        %472 = vmatpush.msra.mxu0 0.0
        %473 = vmatpush.msra.mxu0 %v451
        %474 = vmatpush.msra.mxu0 %v450
        %475 = vmatmul.f32.gmra.mxu0 %v457
        %v476 = vpop.f32.mrf.mxu0
        %v477 = vadd.f32 0.0, %v476
        %478 = vdwg.mxu0
        %479 = vst [vmem:[#allocation2] sm:$0xff] %v477
        %v480 = vld [vmem:[#allocation2] sm:$0xff]
        %v481 = vld [vmem:[#allocation9] sm:$0xff]
        %486 = vrot.lane.b32.xlu0 %v450, 127
        %v487 = vpop.permute.xlu0 %486
        %488 = vrot.lane.b32.xlu0 %v452, 127
        %v489 = vpop.permute.xlu0 %488
        %490 = vrot.lane.b32.xlu0 %v451, 127
        %v491 = vpop.permute.xlu0 %490
        %492 = vrot.lane.b32.xlu0 %v453, 127
        %v493 = vpop.permute.xlu0 %492
        %vm494 = vcmask 1039360
        %v495 = vsel %vm494, %v487, %v489
        %v496 = vsel %vm494, %v491, %v493
        %v500 = vsel %vm455, %v481, 0
        %502 = vmatpush.msra.mxu0 0.0
        %503 = vmatpush.msra.mxu0 0.0
        %504 = vmatpush.msra.mxu0 0.0
        %505 = vmatpush.msra.mxu0 0.0
        %506 = vmatpush.msra.mxu0 0.0
        %507 = vmatpush.msra.mxu0 0.0
        %508 = vmatpush.msra.mxu0 0.0
        %509 = vmatpush.msra.mxu0 0.0
        %510 = vmatpush.msra.mxu0 0.0
        %511 = vmatpush.msra.mxu0 0.0
        %512 = vmatpush.msra.mxu0 0.0
        %513 = vmatpush.msra.mxu0 0.0
        %514 = vmatpush.msra.mxu0 0.0
        %515 = vmatpush.msra.mxu0 0.0
        %516 = vmatpush.msra.mxu0 %v496
        %517 = vmatpush.msra.mxu0 %v495
        %518 = vmatmul.f32.gmra.mxu0 %v500
        %v519 = vpop.f32.mrf.mxu0
        %v520 = vadd.f32 0.0, %v519
        %521 = vdwg.mxu0
        %v522 = vadd.f32 %v480, %v520
        %523 = vst [vmem:[#allocation2] sm:$0xff] %v522
        %v524 = vld [vmem:[#allocation2] sm:$0xff]
        %v525 = vld [vmem:[#allocation11] sm:$0xff]
        %526 = vrot.lane.b32.xlu0 %v450, 119
        %v527 = vpop.permute.xlu0 %526
        %528 = vrot.lane.b32.xlu0 %v452, 119
        %v529 = vpop.permute.xlu0 %528
        %530 = vrot.lane.b32.xlu0 %v451, 119
        %v531 = vpop.permute.xlu0 %530
        %532 = vrot.lane.b32.xlu0 %v453, 119
        %v533 = vpop.permute.xlu0 %532
        %vm534 = vcmask 973824
        %v535 = vsel %vm534, %v527, %v529
        %v536 = vsel %vm534, %v531, %v533
        %v540 = vsel %vm455, %v525, 0
        %542 = vmatpush.msra.mxu0 0.0
        %543 = vmatpush.msra.mxu0 0.0
        %544 = vmatpush.msra.mxu0 0.0
        %545 = vmatpush.msra.mxu0 0.0
        %546 = vmatpush.msra.mxu0 0.0
        %547 = vmatpush.msra.mxu0 0.0
        %548 = vmatpush.msra.mxu0 0.0
        %549 = vmatpush.msra.mxu0 0.0
        %550 = vmatpush.msra.mxu0 0.0
        %551 = vmatpush.msra.mxu0 0.0
        %552 = vmatpush.msra.mxu0 0.0
        %553 = vmatpush.msra.mxu0 0.0
        %554 = vmatpush.msra.mxu0 0.0
        %555 = vmatpush.msra.mxu0 0.0
        %556 = vmatpush.msra.mxu0 %v536
        %557 = vmatpush.msra.mxu0 %v535
        %558 = vmatmul.f32.gmra.mxu0 %v540
        %v559 = vpop.f32.mrf.mxu0
        %v560 = vadd.f32 0.0, %v559
        %561 = vdwg.mxu0
        %v562 = vadd.f32 %v524, %v560
        %563 = vst [vmem:[#allocation2] sm:$0xff] %v562
        %v564 = vld [vmem:[#allocation2] sm:$0xff]
        %v565 = vld [vmem:[#allocation12] sm:$0xff]
        %566 = vrot.lane.b32.xlu0 %v450, 118
        %v567 = vpop.permute.xlu0 %566
        %568 = vrot.lane.b32.xlu0 %v452, 118
        %v569 = vpop.permute.xlu0 %568
        %570 = vrot.lane.b32.xlu0 %v451, 118
        %v571 = vpop.permute.xlu0 %570
        %572 = vrot.lane.b32.xlu0 %v453, 118
        %v573 = vpop.permute.xlu0 %572
        %vm574 = vcmask 965632
        %v575 = vsel %vm574, %v567, %v569
        %v576 = vsel %vm574, %v571, %v573
        %v580 = vsel %vm455, %v565, 0
        %582 = vmatpush.msra.mxu0 0.0
        %583 = vmatpush.msra.mxu0 0.0
        %584 = vmatpush.msra.mxu0 0.0
        %585 = vmatpush.msra.mxu0 0.0
        %586 = vmatpush.msra.mxu0 0.0
        %587 = vmatpush.msra.mxu0 0.0
        %588 = vmatpush.msra.mxu0 0.0
        %589 = vmatpush.msra.mxu0 0.0
        %590 = vmatpush.msra.mxu0 0.0
        %591 = vmatpush.msra.mxu0 0.0
        %592 = vmatpush.msra.mxu0 0.0
        %593 = vmatpush.msra.mxu0 0.0
        %594 = vmatpush.msra.mxu0 0.0
        %595 = vmatpush.msra.mxu0 0.0
        %596 = vmatpush.msra.mxu0 %v576
        %597 = vmatpush.msra.mxu0 %v575
        %598 = vmatmul.f32.gmra.mxu0 %v580
        %v599 = vpop.f32.mrf.mxu0
        %v600 = vadd.f32 0.0, %v599
        %601 = vdwg.mxu0
        %v602 = vadd.f32 %v564, %v600
        %603 = vst [vmem:[#allocation2] sm:$0xff] %v602
        %v604 = vld [vmem:[#allocation2] sm:$0xff]
        %605 = vst [vmem:[%s430] sm:$0xff] %v604
        %v606 = vlaneseq
        %v607 = vand.u32 %v606, 127
        %s608 = smul.u32 %s35, 128
        %v609 = vstv %s608
        %v610 = vadd.s32 %v607, %v609
        %v611 = vcvt.s32.f32 %v610
        %v612 = vrcp.pop 9.0
        %v613 = vmul.f32 9.0, %v612
        %v614 = vsub.f32 1.0, %v613
        %v615 = vmul.f32 %v612, %v614
        %v616 = vadd.f32 %v612, %v615
        %vm617 = vweird.f32 %v612
        %v618 = vsel %vm617, %v612, %v616
        %v619 = vmul.f32 %v611, %v618
        %v620 = vfloor.f32 %v619
        %v621 = vmul.f32 %v620, 9.0
        %v622 = vsub.f32 %v611, %v621
        %vm623 = vcmp.lt.s32.totalorder %v610, 72
        %vm624 = vcmp.lt.f32.partialorder %v622, 8.0
        %vm625 = vmand %vm623, %vm624
        %v626 = vsel %vm625, 1.0, 0.0
        %v627 = vmul.f32 %v604, %v626
        %628 = vadd.xlane.f32.xlu0 %v627
        %v629 = vpop.xlane.xlu0 %628
        %vm630 = vcmask 7168
        %631 = vst.msk [vmem:[%s449] sm:$0xff] %vm630, %v629
        %v632 = vmul.f32 %v627, %v627
        %633 = vadd.xlane.f32.xlu0 %v632
        %v634 = vpop.xlane.xlu0 %633
        %vm635 = vcmask 15368
        %636 = vst.msk [vmem:[%s449] sm:$0xff] %vm635, %v634
        %s637 = sand.u32 %s198, 1
        %s638 = scalar_lea.sflag [#allocation5], %s637
        %s639 = sand.u32 %s198, 1
        %s640 = smul.addr %s639, 8
        %s641 = scalar_lea.vmem [#allocation14], %s640
        %p642 = scmp.lt.s32.totalorder %s34, 1
        %s643 = scalar_select %p642, %s34, 1
        %p644 = scmp.lt.s32.totalorder %s35, 0
        %s645 = scalar_select %p644, %s35, 0
        %s646 = sadd.s32 %s645, %s643
        %s647 = smul.addr %s646, 8
        %s648 = scalar_lea.vmem %s7, %s647
        // Predicated region
        $region69: #{tpu_custom_call.1} parent=43 // pred_check
          %p649 = pneg %p208
        $region70: #{tpu_custom_call.1} parent=43 // pred_check_branch
          %651 = sbr.rel (%p649) target = $region72
        $region71: #{tpu_custom_call.1} parent=43 // pred_region
          %653 = vsyncadd %s638, 0
          %s654 = sadd.s32 %s35, %s34
          %s655 = smul.addr %s654, 8
          %s656 = scalar_lea.hbm %s6, %s655
          %s658 = sshll.u32 %s641, 4
          %s659 = int_to_ptr.vmem [resolvable:$true] %s658
          %s660 = sshll.u32 %s656, 4
          %s661 = int_to_ptr.hbm [resolvable:$true] %s660
          %663 = dma.vmem_to_hbm [thread:$0]  %s659, 128, %s661, %s638
        $region72: #{tpu_custom_call.1} parent=43 // pred_fallthru
          _
        // Predicated region
        $region73: #{tpu_custom_call.1} parent=43 // pred_check
          %p664 = pneg %p236
        $region74: #{tpu_custom_call.1} parent=43 // pred_check_branch
          %666 = sbr.rel (%p664) target = $region76
        $region75: #{tpu_custom_call.1} parent=43 // pred_region
          _
        $region76: #{tpu_custom_call.1} parent=43 // pred_fallthru
          _
      $region44: #{tpu_custom_call.1} parent=5 // pred_fallthru
        _
      %p667 = scmp.le.s32.totalorder 2, %s25
      // Predicated region
      $region77: #{tpu_custom_call.1} parent=5 // pred_check
        %p668 = pneg %p667
      $region78: #{tpu_custom_call.1} parent=5 // pred_check_branch
        %670 = sbr.rel (%p668) target = $region80
      $region79: #{tpu_custom_call.1} parent=5 // pred_region
        %s671 = ssub.s32 %s25, 2
        // Predicated region
        $region81: #{tpu_custom_call.1} parent=79 // pred_check
          %p672 = pneg %p214
        $region82: #{tpu_custom_call.1} parent=79 // pred_check_branch
          %674 = sbr.rel (%p672) target = $region84
        $region83: #{tpu_custom_call.1} parent=79 // pred_region
          %s675 = sand.u32 %s199, 1
          %s676 = scalar_lea.sflag [#allocation5], %s675
          %s677 = sand.u32 %s199, 1
          %s678 = smul.addr %s677, 8
          %s679 = scalar_lea.vmem [#allocation14], %s678
          %681 = dma.done %s676, 128
        $region84: #{tpu_custom_call.1} parent=79 // pred_fallthru
          _
        // Predicated region
        $region85: #{tpu_custom_call.1} parent=79 // pred_check
          %p682 = pneg %p242
        $region86: #{tpu_custom_call.1} parent=79 // pred_check_branch
          %684 = sbr.rel (%p682) target = $region88
        $region87: #{tpu_custom_call.1} parent=79 // pred_region
          %p685 = scmp.lt.s32.totalorder %s36, 1
          %s686 = scalar_select %p685, %s36, 1
          %p687 = scmp.lt.s32.totalorder %s37, 0
          %s688 = scalar_select %p687, %s37, 0
          %s689 = sadd.s32 %s688, %s686
          %s690 = smul.addr %s689, 8
          %s691 = scalar_lea.vmem %s7, %s690
        $region88: #{tpu_custom_call.1} parent=79 // pred_fallthru
          _
      $region80: #{tpu_custom_call.1} parent=5 // pred_fallthru
        _
    $region6: #{tpu_custom_call.1} parent=1 // loop_footer
      %s29 = sadd.s32 1, %s25
    $region7: #{tpu_custom_call.1} parent=1 // loop_footer_branch
      %24 = sbr.rel target = $region3
    $region8: #{tpu_custom_call.1} parent=1 // loop_exit
      _
    %692 = vsyncpa [#allocation4], 1
    %s693 = scalar_lea.sflag [#allocation4], 1
    %694 = vsyncpa %s693, 1
    %695 = vsyncpa [#allocation7], 1
    %s696 = scalar_lea.sflag [#allocation7], 1
    %697 = vsyncpa %s696, 1
    %698 = vsyncpa [#allocation10], 1
    %699 = vsyncpa [#allocation13], 1
    %700 = vsyncpa [#allocation5], 1
    %s701 = scalar_lea.sflag [#allocation5], 1
    %702 = vsyncpa %s701, 1

</llo_original>
